<compile_context>
chip_gen: v5e
topology: v5e:2x2
jax: 0.10.0
libtpu: 0.0.40
codegen_flags: <defaults>
</compile_context>

<pallas_src>
import jax
import jax.numpy as jnp
from jax.experimental import pallas as pl
from jax.experimental.pallas import tpu as pltpu

LANE = 128      # TPU lane width; every layer width is zero-padded to this.
SUBLANE = 8     # f32 sublane packing.


def _round_up(n, m):
    return ((n + m - 1) // m) * m


def pack_params(weights, biases):
    """Pack all weights/biases into a single lane-dense f32 slab (one DMA).

    Row layout (all rows are 128 lanes wide, zero padded):
      [0, in_pad)                 : input-layer weight rows, w0[k, :h0]
      [w_off[i], w_off[i]+128)    : layer i>=1 weight as a padded 128x128 tile
      [bias_off + i]              : bias of layer i, padded to 128 lanes
    """
    num_layers = len(weights)
    in_dim = weights[0].shape[0]
    in_pad = _round_up(in_dim, SUBLANE)

    blocks, w_offsets = [], []
    r = 0

    w0 = jnp.zeros((in_pad, LANE), jnp.float32)
    w0 = w0.at[:in_dim, : weights[0].shape[1]].set(jnp.asarray(weights[0], jnp.float32))
    blocks.append(w0)
    w_offsets.append(r)
    r += in_pad

    for i in range(1, num_layers):
        wi = jnp.zeros((LANE, LANE), jnp.float32)
        wi = wi.at[: weights[i].shape[0], : weights[i].shape[1]].set(
            jnp.asarray(weights[i], jnp.float32))
        blocks.append(wi)
        w_offsets.append(r)
        r += LANE

    bias_off = r
    b_rows = _round_up(num_layers, SUBLANE)
    bblk = jnp.zeros((b_rows, LANE), jnp.float32)
    for i, b in enumerate(biases):
        bblk = bblk.at[i, : b.shape[0]].set(jnp.asarray(b, jnp.float32))
    blocks.append(bblk)

    slab = jnp.concatenate(blocks, axis=0)
    return slab, tuple(w_offsets), bias_off


def make_fcpa_kernel(in_dim, num_layers, w_offsets, bias_off):
    """Kernel refs: (x_ref (tb,in_dim), p_ref (rows,128), o_ref (tb,128))."""

    def kernel(x_ref, p_ref, o_ref):
        tb = x_ref.shape[0]
        x = x_ref[...].astype(jnp.float32)                        # (tb, in_dim)

        # ---- layer 0: K=in_dim is tiny -> unrolled VPU FMAs, no MXU pass ----
        h = jnp.broadcast_to(p_ref[bias_off : bias_off + 1, :], (tb, LANE))
        for k in range(in_dim):
            w_row = p_ref[w_offsets[0] + k : w_offsets[0] + k + 1, :]   # (1,128)
            h = h + x[:, k : k + 1] * w_row
        if num_layers > 1:
            h = jnp.maximum(h, 0.0)                                # relu

        # ---- layers 1..L-1: lane-dense 128x128 matmuls on the MXU ----
        for i in range(1, num_layers):
            w = p_ref[w_offsets[i] : w_offsets[i] + LANE, :]       # (128,128)
            h = jnp.dot(h, w, preferred_element_type=jnp.float32)
            h = h + p_ref[bias_off + i : bias_off + i + 1, :]
            if i < num_layers - 1:
                h = jnp.maximum(h, 0.0)                            # relu (not on output)

        o_ref[...] = h                                             # lane-dense store

    return kernel


def build_fcpa_forward(weights, biases):
    """Build a jitted forward fn; all parameter prep is done once, here."""
    num_layers = len(weights)
    in_dim = weights[0].shape[0]
    out_dim = weights[-1].shape[1]
    assert all(w.shape[1] <= LANE for w in weights), "layer widths must be <= 128"
    assert all(w.shape[0] <= LANE for w in weights[1:])

    slab, w_offsets, bias_off = pack_params(weights, biases)
    slab_shape = slab.shape
    kernel = make_fcpa_kernel(in_dim, num_layers, w_offsets, bias_off)

    @jax.jit
    def forward(x):
        x = x.astype(jnp.float32)
        B = x.shape[0]
        # Gridless for small batches; batch-tiled, megacore-parallel for large.
        if B >= 512 and B % 256 == 0:
            tb = 256
        else:
            tb = B
        grid = (B // tb,)

        out_pad = pl.pallas_call(
            kernel,
            out_shape=jax.ShapeDtypeStruct((B, LANE), jnp.float32),
            grid=grid,
            in_specs=[
                pl.BlockSpec((tb, in_dim), lambda i: (i, 0)),
                pl.BlockSpec(slab_shape, lambda i: (0, 0)),   # single resident param DMA
            ],
            out_specs=pl.BlockSpec((tb, LANE), lambda i: (i, 0)),
            compiler_params=pltpu.CompilerParams(
                dimension_semantics=("parallel",)),
        )(x, slab)
        # Logits live in the first out_dim lanes; the rest are exact zeros.
        return out_pad[:, :out_dim]

    return forward


def init_fcpa_params(key, input_shape, output_shape, hidden_layers):
    """Deterministic init mimicking torch.nn.Linear default U(-1/sqrt(fan_in), +)."""
    sizes = [input_shape] + list(hidden_layers) + [output_shape]
    weights, biases = [], []
    for i in range(len(sizes) - 1):
        fan_in, fan_out = sizes[i], sizes[i + 1]
        key, kw, kb = jax.random.split(key, 3)
        bound = 1.0 / jnp.sqrt(jnp.float32(fan_in))
        # stored as [in, out] (transposed relative to torch's [out, in])
        w = jax.random.uniform(kw, (fan_in, fan_out), jnp.float32, -bound, bound)
        b = jax.random.uniform(kb, (fan_out,), jnp.float32, -bound, bound)
        weights.append(w)
        biases.append(b)
    return weights, biases


if __name__ == "__main__":
    # CartPole A3C config: state dim 4, two actions, two hidden layers of 32.
    input_shape, output_shape, hidden_layers = 4, 2, [32, 32]

    key = jax.random.PRNGKey(0)
    key, kx = jax.random.split(key)
    weights, biases = init_fcpa_params(key, input_shape, output_shape, hidden_layers)
    fcpa_forward = build_fcpa_forward(weights, biases)

    def reference(x):
        h = x
        for i, (w, b) in enumerate(zip(weights, biases)):
            h = jnp.dot(h, w, precision=jax.lax.Precision.HIGHEST) + b
            if i < len(weights) - 1:
                h = jnp.maximum(h, 0.0)
        return h

    # Small batch (single actor step style).
    x_small = jax.random.normal(kx, (2, input_shape), jnp.float32)
    logits = jax.block_until_ready(fcpa_forward(x_small))
    ref = jax.block_until_ready(reference(x_small))
    assert logits.shape == (2, output_shape), logits.shape
    assert jnp.allclose(logits, ref, atol=1e-5, rtol=1e-5), (logits, ref)

    # Larger batch exercises the batch-tiled / megacore-parallel path.
    key, kx2 = jax.random.split(key)
    x_big = jax.random.normal(kx2, (512, input_shape), jnp.float32)
    logits_big = jax.block_until_ready(fcpa_forward(x_big))
    ref_big = jax.block_until_ready(reference(x_big))
    assert logits_big.shape == (512, output_shape), logits_big.shape
    assert jnp.allclose(logits_big, ref_big, atol=1e-5, rtol=1e-5)

    print("KERNEL_OK")
</pallas_src>

<mosaic_0001>
module attributes {stable_mosaic.version = 11 : i64} {
  func.func @kernel(%arg0: i32, %arg1: memref<2x4xf32, #tpu.memory_space<vmem>>, %arg2: memref<272x128xf32, #tpu.memory_space<vmem>>, %arg3: memref<2x128xf32, #tpu.memory_space<vmem>>) attributes {dimension_semantics = [#tpu.dimension_semantics<parallel>], iteration_bounds = array<i64: 1>, scalar_prefetch = 0 : i64, scratch_operands = 0 : i64, tpu.core_type = #tpu.core_type<tc>, window_params = [{transform_indices = @transform_0, window_bounds = array<i64: 2, 4>}, {pipeline_mode = #tpu.pipeline_mode<synchronous>, transform_indices = @transform_1, window_bounds = array<i64: 272, 128>}, {transform_indices = @transform_2, window_bounds = array<i64: 2, 128>}]} {
    %c0 = arith.constant 0 : index
    %c0_0 = arith.constant 0 : index
    %0 = vector.load %arg1[%c0, %c0_0] : memref<2x4xf32, #tpu.memory_space<vmem>>, vector<2x4xf32>
    %c264 = arith.constant 264 : index
    %c0_1 = arith.constant 0 : index
    %1 = vector.load %arg2[%c264, %c0_1] : memref<272x128xf32, #tpu.memory_space<vmem>>, vector<1x128xf32>
    %2 = vector.shape_cast %1 : vector<1x128xf32> to vector<1x128xf32>
    %3 = vector.broadcast %2 : vector<1x128xf32> to vector<2x128xf32>
    %c0_2 = arith.constant 0 : index
    %c0_3 = arith.constant 0 : index
    %4 = vector.load %arg2[%c0_2, %c0_3] : memref<272x128xf32, #tpu.memory_space<vmem>>, vector<1x128xf32>
    %5 = vector.extract_strided_slice %0 {offsets = [0, 0], sizes = [2, 1], strides = [1, 1]} : vector<2x4xf32> to vector<2x1xf32>
    %6 = vector.broadcast %5 : vector<2x1xf32> to vector<2x128xf32>
    %7 = vector.broadcast %4 : vector<1x128xf32> to vector<2x128xf32>
    %8 = arith.mulf %6, %7 : vector<2x128xf32>
    %9 = arith.addf %3, %8 : vector<2x128xf32>
    %c1 = arith.constant 1 : index
    %c0_4 = arith.constant 0 : index
    %10 = vector.load %arg2[%c1, %c0_4] : memref<272x128xf32, #tpu.memory_space<vmem>>, vector<1x128xf32>
    %11 = vector.extract_strided_slice %0 {offsets = [0, 1], sizes = [2, 1], strides = [1, 1]} : vector<2x4xf32> to vector<2x1xf32>
    %12 = vector.broadcast %11 : vector<2x1xf32> to vector<2x128xf32>
    %13 = vector.broadcast %10 : vector<1x128xf32> to vector<2x128xf32>
    %14 = arith.mulf %12, %13 : vector<2x128xf32>
    %15 = arith.addf %9, %14 : vector<2x128xf32>
    %c2 = arith.constant 2 : index
    %c0_5 = arith.constant 0 : index
    %16 = vector.load %arg2[%c2, %c0_5] : memref<272x128xf32, #tpu.memory_space<vmem>>, vector<1x128xf32>
    %17 = vector.extract_strided_slice %0 {offsets = [0, 2], sizes = [2, 1], strides = [1, 1]} : vector<2x4xf32> to vector<2x1xf32>
    %18 = vector.broadcast %17 : vector<2x1xf32> to vector<2x128xf32>
    %19 = vector.broadcast %16 : vector<1x128xf32> to vector<2x128xf32>
    %20 = arith.mulf %18, %19 : vector<2x128xf32>
    %21 = arith.addf %15, %20 : vector<2x128xf32>
    %c3 = arith.constant 3 : index
    %c0_6 = arith.constant 0 : index
    %22 = vector.load %arg2[%c3, %c0_6] : memref<272x128xf32, #tpu.memory_space<vmem>>, vector<1x128xf32>
    %23 = vector.extract_strided_slice %0 {offsets = [0, 3], sizes = [2, 1], strides = [1, 1]} : vector<2x4xf32> to vector<2x1xf32>
    %24 = vector.broadcast %23 : vector<2x1xf32> to vector<2x128xf32>
    %25 = vector.broadcast %22 : vector<1x128xf32> to vector<2x128xf32>
    %26 = arith.mulf %24, %25 : vector<2x128xf32>
    %27 = arith.addf %21, %26 : vector<2x128xf32>
    %cst = arith.constant 0.000000e+00 : f32
    %28 = vector.broadcast %cst : f32 to vector<2x128xf32>
    %29 = arith.maximumf %27, %28 : vector<2x128xf32>
    %c8 = arith.constant 8 : index
    %c0_7 = arith.constant 0 : index
    %30 = vector.load %arg2[%c8, %c0_7] : memref<272x128xf32, #tpu.memory_space<vmem>>, vector<128x128xf32>
    %cst_8 = arith.constant dense<0.000000e+00> : vector<2x128xf32>
    %31 = tpu.matmul %29, %30, %cst_8 {dimension_numbers = #tpu.dot_dimension_numbers<[1], [0], [0], [1], [0, 0, 1, 1], [], []>} : vector<2x128xf32>, vector<128x128xf32>, vector<2x128xf32> -> vector<2x128xf32>
    %c265 = arith.constant 265 : index
    %c0_9 = arith.constant 0 : index
    %32 = vector.load %arg2[%c265, %c0_9] : memref<272x128xf32, #tpu.memory_space<vmem>>, vector<1x128xf32>
    %33 = vector.broadcast %32 : vector<1x128xf32> to vector<2x128xf32>
    %34 = arith.addf %31, %33 : vector<2x128xf32>
    %cst_10 = arith.constant 0.000000e+00 : f32
    %35 = vector.broadcast %cst_10 : f32 to vector<2x128xf32>
    %36 = arith.maximumf %34, %35 : vector<2x128xf32>
    %c136 = arith.constant 136 : index
    %c0_11 = arith.constant 0 : index
    %37 = vector.load %arg2[%c136, %c0_11] : memref<272x128xf32, #tpu.memory_space<vmem>>, vector<128x128xf32>
    %cst_12 = arith.constant dense<0.000000e+00> : vector<2x128xf32>
    %38 = tpu.matmul %36, %37, %cst_12 {dimension_numbers = #tpu.dot_dimension_numbers<[1], [0], [0], [1], [0, 0, 1, 1], [], []>} : vector<2x128xf32>, vector<128x128xf32>, vector<2x128xf32> -> vector<2x128xf32>
    %c266 = arith.constant 266 : index
    %c0_13 = arith.constant 0 : index
    %39 = vector.load %arg2[%c266, %c0_13] : memref<272x128xf32, #tpu.memory_space<vmem>>, vector<1x128xf32>
    %40 = vector.broadcast %39 : vector<1x128xf32> to vector<2x128xf32>
    %41 = arith.addf %38, %40 : vector<2x128xf32>
    %c0_14 = arith.constant 0 : index
    %c0_15 = arith.constant 0 : index
    %42 = vector.load %arg3[%c0_14, %c0_15] : memref<2x128xf32, #tpu.memory_space<vmem>>, vector<2x128xf32>
    tpu.vector_store %arg3[%c0_14, %c0_15], %41 {strides = array<i32>} : memref<2x128xf32, #tpu.memory_space<vmem>>, vector<2x128xf32>,
    return
  }
  func.func @transform_0(%arg0: i32) -> (i32, i32) {
    %c0_i32 = arith.constant 0 : i32
    %c0_i32_0 = arith.constant 0 : i32
    return %arg0, %c0_i32 : i32, i32
  }
  func.func @transform_1(%arg0: i32) -> (i32, i32) {
    %c0_i32 = arith.constant 0 : i32
    %c0_i32_0 = arith.constant 0 : i32
    %c0_i32_1 = arith.constant 0 : i32
    return %c0_i32, %c0_i32_0 : i32, i32
  }
  func.func @transform_2(%arg0: i32) -> (i32, i32) {
    %c0_i32 = arith.constant 0 : i32
    %c0_i32_0 = arith.constant 0 : i32
    return %arg0, %c0_i32 : i32, i32
  }
}

</mosaic_0001>

<llo_original>
// kernel: forward.1
$region0: #{forward.1}
  #allocation0 [shape = 'u32[]', space=smem, size = 0x4, offset = 0x4, fixed_abs, tag = 'smem constant byte address 0x4 - core index']
  #allocation1 [shape = 'u32[72,128]{1,0:T(1,128)}', space=vmem, size = 0x9000, scoped, tag = 'internal scratch']
  %s0 = inlined_call_operand.hbm [shape: f32[2,4], index: 0, kind: input, shape index: {}]
  %s1 = inlined_call_operand.hbm [shape: f32[272,128], index: 1, kind: input, shape index: {}]
  %s2 = inlined_call_operand.hbm [shape: f32[2,128], index: 2, kind: output, shape index: {}]
  %s3 = sld [smem:[#allocation0]]
  $region26: #{forward.1} parent=0
    _
  %s5 = ssub.s32 1, %s3
  %s6 = scalar_select 0, %s5, %s3
  $region1: #{forward.1} parent=0
    #allocation2 [shape = 'u8[1024]{0}', space=vmem, size = 0x400, scoped, tag = 'input window, operand 0, single buffered']
    #allocation3 [shape = 's32[1]{0}', space=sflag, size = 0x4, scoped, tag = 'scoped memory for forward.1']
    #allocation4 [shape = 's32[1]{0}', space=sflag, size = 0x4, scoped, tag = 'scoped memory for forward.1']
    #allocation5 [shape = 'u8[139264]{0}', space=vmem, size = 0x22000, scoped, tag = 'input window, operand 1, single buffered']
    #allocation6 [shape = 's32[1]{0}', space=sflag, size = 0x4, scoped, tag = 'scoped memory for forward.1']
    #allocation7 [shape = 'u8[1024]{0}', space=vmem, size = 0x400, scoped, tag = 'output window, operand 0, single buffered']
    %7 = vsyncpa [#allocation3], 0
    %8 = vsyncpa [#allocation6], 0
    %9 = vsyncpa [#allocation4], 0
    // Predicated region
    $region2: #{forward.1} parent=1 // pred_check
      _
    $region3: #{forward.1} parent=1 // pred_check_branch
      %11 = sbr.rel (0) target = $region5
    $region4: #{forward.1} parent=1 // pred_region
      %13 = vsyncadd [#allocation3], 0
      %s15 = sshll.u32 %s0, 4
      %s16 = int_to_ptr.hbm [resolvable:$true] %s15
      %s17 = sshll.u32 [#allocation2], 4
      %s18 = int_to_ptr.vmem [resolvable:$true] %s17
      %20 = dma.hbm_to_vmem [thread:$0]  %s16, 32, %s18, [#allocation3]
    $region5: #{forward.1} parent=1 // pred_fallthru
      _
    // Predicated region
    $region6: #{forward.1} parent=1 // pred_check
      _
    $region7: #{forward.1} parent=1 // pred_check_branch
      %22 = sbr.rel (0) target = $region9
    $region8: #{forward.1} parent=1 // pred_region
      %24 = vsyncadd [#allocation6], 0
      %s25 = sshll.u32 %s1, 4
      %s26 = int_to_ptr.hbm [resolvable:$true] %s25
      %s27 = sshll.u32 [#allocation5], 4
      %s28 = int_to_ptr.vmem [resolvable:$true] %s27
      %33 = dma.hbm_to_vmem [thread:$0]  %s26, 4352, %s28, [#allocation6], 128, 128, 8
    $region9: #{forward.1} parent=1 // pred_fallthru
      _
    // Predicated region
    $region10: #{forward.1} parent=1 // pred_check
      _
    $region11: #{forward.1} parent=1 // pred_check_branch
      %35 = sbr.rel (0) target = $region13
    $region12: #{forward.1} parent=1 // pred_region
      %37 = dma.done [#allocation3], 32
    $region13: #{forward.1} parent=1 // pred_fallthru
      _
    // Predicated region
    $region14: #{forward.1} parent=1 // pred_check
      _
    $region15: #{forward.1} parent=1 // pred_check_branch
      %39 = sbr.rel (0) target = $region17
    $region16: #{forward.1} parent=1 // pred_region
      %41 = dma.done [#allocation6], 4352
    $region17: #{forward.1} parent=1 // pred_fallthru
      _
    %v42 = vld [vmem:[#allocation2] sm:$0x3]
    %v43 = vld [vmem:[#allocation5 + $0x108] sm:$0x1]
    %v44 = vperm.slane %v43, 0
    %v45 = vld [vmem:[#allocation5] sm:$0x1]
    %47 = vset.pattern.permute.xlu0 0
    %48 = vperm.xlu0 %47, %v42
    %v49 = vpop.permute.xlu0 %48
    %v51 = vperm.slane %v45, 0
    %v52 = vmul.f32 %v49, %v51
    %v53 = vadd.f32 %v44, %v52
    %v54 = vld [vmem:[#allocation5 + $0x1] sm:$0x1]
    %55 = vset.pattern.permute.xlu0 1
    %56 = vperm.xlu0 %55, %v42
    %v57 = vpop.permute.xlu0 %56
    %v59 = vperm.slane %v54, 0
    %v60 = vmul.f32 %v57, %v59
    %v61 = vadd.f32 %v53, %v60
    %v62 = vld [vmem:[#allocation5 + $0x2] sm:$0x1]
    %63 = vset.pattern.permute.xlu0 2
    %64 = vperm.xlu0 %63, %v42
    %v65 = vpop.permute.xlu0 %64
    %v67 = vperm.slane %v62, 0
    %v68 = vmul.f32 %v65, %v67
    %v69 = vadd.f32 %v61, %v68
    %v70 = vld [vmem:[#allocation5 + $0x3] sm:$0x1]
    %71 = vset.pattern.permute.xlu0 3
    %72 = vperm.xlu0 %71, %v42
    %v73 = vpop.permute.xlu0 %72
    %v75 = vperm.slane %v70, 0
    %v76 = vmul.f32 %v73, %v75
    %v77 = vadd.f32 %v69, %v76
    %v78 = vmax.f32 %v77, 0.0
    %v79 = vld [vmem:[#allocation5 + $0x8] sm:$0xff]
    %v80 = vld [vmem:[#allocation5 + $0x10] sm:$0xff]
    %v81 = vld [vmem:[#allocation5 + $0x18] sm:$0xff]
    %v82 = vld [vmem:[#allocation5 + $0x20] sm:$0xff]
    %v83 = vld [vmem:[#allocation5 + $0x28] sm:$0xff]
    %v84 = vld [vmem:[#allocation5 + $0x30] sm:$0xff]
    %v85 = vld [vmem:[#allocation5 + $0x38] sm:$0xff]
    %v86 = vld [vmem:[#allocation5 + $0x40] sm:$0xff]
    %v87 = vld [vmem:[#allocation5 + $0x48] sm:$0xff]
    %v88 = vld [vmem:[#allocation5 + $0x50] sm:$0xff]
    %v89 = vld [vmem:[#allocation5 + $0x58] sm:$0xff]
    %v90 = vld [vmem:[#allocation5 + $0x60] sm:$0xff]
    %v91 = vld [vmem:[#allocation5 + $0x68] sm:$0xff]
    %v92 = vld [vmem:[#allocation5 + $0x70] sm:$0xff]
    %v93 = vld [vmem:[#allocation5 + $0x78] sm:$0xff]
    %v94 = vld [vmem:[#allocation5 + $0x80] sm:$0xff]
    %v95 = vld [vmem:[#allocation5 + $0x109] sm:$0x1]
    %v96 = vperm.slane %v95, 0
    %97 = vmatpush.msra.mxu0 %v94
    %98 = vmatpush.msra.mxu0 %v93
    %99 = vmatpush.msra.mxu0 %v92
    %100 = vmatpush.msra.mxu0 %v91
    %101 = vmatpush.msra.mxu0 %v90
    %102 = vmatpush.msra.mxu0 %v89
    %103 = vmatpush.msra.mxu0 %v88
    %104 = vmatpush.msra.mxu0 %v87
    %105 = vmatpush.msra.mxu0 %v86
    %106 = vmatpush.msra.mxu0 %v85
    %107 = vmatpush.msra.mxu0 %v84
    %108 = vmatpush.msra.mxu0 %v83
    %109 = vmatpush.msra.mxu0 %v82
    %110 = vmatpush.msra.mxu0 %v81
    %111 = vmatpush.msra.mxu0 %v80
    %112 = vmatpush.msra.mxu0 %v79
    %113 = vmatmul.f32.gmra.mxu0 %v78
    %v114 = vpop.f32.mrf.mxu0
    %v115 = vadd.f32 %v96, %v114
    %116 = vdwg.mxu0
    %v117 = vmax.f32 %v115, 0.0
    %v118 = vld [vmem:[#allocation5 + $0x88] sm:$0xff]
    %v119 = vld [vmem:[#allocation5 + $0x90] sm:$0xff]
    %v120 = vld [vmem:[#allocation5 + $0x98] sm:$0xff]
    %v121 = vld [vmem:[#allocation5 + $0xa0] sm:$0xff]
    %v122 = vld [vmem:[#allocation5 + $0xa8] sm:$0xff]
    %v123 = vld [vmem:[#allocation5 + $0xb0] sm:$0xff]
    %v124 = vld [vmem:[#allocation5 + $0xb8] sm:$0xff]
    %v125 = vld [vmem:[#allocation5 + $0xc0] sm:$0xff]
    %v126 = vld [vmem:[#allocation5 + $0xc8] sm:$0xff]
    %v127 = vld [vmem:[#allocation5 + $0xd0] sm:$0xff]
    %v128 = vld [vmem:[#allocation5 + $0xd8] sm:$0xff]
    %v129 = vld [vmem:[#allocation5 + $0xe0] sm:$0xff]
    %v130 = vld [vmem:[#allocation5 + $0xe8] sm:$0xff]
    %v131 = vld [vmem:[#allocation5 + $0xf0] sm:$0xff]
    %v132 = vld [vmem:[#allocation5 + $0xf8] sm:$0xff]
    %v133 = vld [vmem:[#allocation5 + $0x100] sm:$0xff]
    %v134 = vld [vmem:[#allocation5 + $0x10a] sm:$0x1]
    %v135 = vperm.slane %v134, 0
    %136 = vmatpush.msra.mxu0 %v133
    %137 = vmatpush.msra.mxu0 %v132
    %138 = vmatpush.msra.mxu0 %v131
    %139 = vmatpush.msra.mxu0 %v130
    %140 = vmatpush.msra.mxu0 %v129
    %141 = vmatpush.msra.mxu0 %v128
    %142 = vmatpush.msra.mxu0 %v127
    %143 = vmatpush.msra.mxu0 %v126
    %144 = vmatpush.msra.mxu0 %v125
    %145 = vmatpush.msra.mxu0 %v124
    %146 = vmatpush.msra.mxu0 %v123
    %147 = vmatpush.msra.mxu0 %v122
    %148 = vmatpush.msra.mxu0 %v121
    %149 = vmatpush.msra.mxu0 %v120
    %150 = vmatpush.msra.mxu0 %v119
    %151 = vmatpush.msra.mxu0 %v118
    %152 = vmatmul.f32.gmra.mxu0 %v117
    %v153 = vpop.f32.mrf.mxu0
    %v154 = vadd.f32 %v135, %v153
    %155 = vdwg.mxu0
    %156 = vst [vmem:[#allocation7] sm:$0x3] %v154
    // Predicated region
    $region18: #{forward.1} parent=1 // pred_check
      _
    $region19: #{forward.1} parent=1 // pred_check_branch
      %158 = sbr.rel (0) target = $region21
    $region20: #{forward.1} parent=1 // pred_region
      %160 = vsyncadd [#allocation4], 0
      %s162 = sshll.u32 [#allocation7], 4
      %s163 = int_to_ptr.vmem [resolvable:$true] %s162
      %s164 = sshll.u32 %s2, 4
      %s165 = int_to_ptr.hbm [resolvable:$true] %s164
      %167 = dma.vmem_to_hbm [thread:$0]  %s163, 32, %s165, [#allocation4]
    $region21: #{forward.1} parent=1 // pred_fallthru
      _
    // Predicated region
    $region22: #{forward.1} parent=1 // pred_check
      _
    $region23: #{forward.1} parent=1 // pred_check_branch
      %169 = sbr.rel (0) target = $region25
    $region24: #{forward.1} parent=1 // pred_region
      %171 = dma.done [#allocation4], 32
    $region25: #{forward.1} parent=1 // pred_fallthru
      _
    %172 = vsyncpa [#allocation3], 1
    %173 = vsyncpa [#allocation6], 1
    %174 = vsyncpa [#allocation4], 1

</llo_original>
